<compile_context>
chip_gen: v6e
topology: v6e:2x2x1
jax: 0.10.0
libtpu: 0.0.40
codegen_flags: <defaults>
</compile_context>

<pallas_src>
import math

import jax
import jax.numpy as jnp
from jax.experimental import pallas as pl
from jax.experimental.pallas import tpu as pltpu

STATE_DIM = 3      # Pendulum observation_space.shape[0]
ACTION_DIM = 1     # Pendulum action_space.shape[0]
HIDDEN = 128
KPAD = 8           # fc1 contraction dim padded: rows 0..2 = x, row 3 = eps, rows 4..7 = 0
LOG_SQRT_2PI = 0.5 * math.log(2.0 * math.pi)


def _round_up(n, m):
    return ((n + m - 1) // m) * m


def actor_kernel(xin_ref, w1_ref, b1_ref, wh_ref, bh_ref, out_ref):
    xin = xin_ref[...]                                    # (KPAD, TB): x^T rows 0..2, eps^T row 3

    # fc1 on the MXU: (128, 8) @ (8, TB) -> (128, TB). w1 columns 3..7 are zero, so the
    # eps row and zero-pad rows contribute nothing. Bias + relu stay on the VPU.
    h = jnp.dot(w1_ref[...], xin, preferred_element_type=jnp.float32) + b1_ref[...]
    h = jnp.maximum(h, 0.0)                               # (128, TB)

    # Fused mu/std heads: (2, 128) @ (128, TB) -> (2, TB); row 0 = mu, row 1 = std pre-act.
    y = jnp.dot(wh_ref[...], h, preferred_element_type=jnp.float32) + bh_ref[...]
    mu = y[0:1, :]                                        # (1, TB)
    std = jnp.logaddexp(y[1:2, :], 0.0)                   # softplus, numerically stable

    # Reparameterized sample: action = mu + std * eps, eps ~ N(0,1) (supplied).
    eps = xin[3:4, :]                                     # (1, TB)
    action = mu + std * eps

    # Normal(mu, std).log_prob(action); action - mu == std*eps, so the quadratic term is
    # exactly -0.5*eps^2 (avoids 0/0 when std underflows).
    log_prob = -0.5 * eps * eps - jnp.log(std) - LOG_SQRT_2PI

    # Tanh squash to [-2, 2] and the corresponding log-prob correction.
    t = jnp.tanh(action)
    out_ref[0:1, :] = t * 2.0                                      # real_action
    out_ref[1:2, :] = log_prob - jnp.log(1.0 - t * t + 1e-7)       # real_log_prob


def actor_forward(x, params, eps, tb=4096):
    """x: (B, STATE_DIM) f32; eps: (B, ACTION_DIM) f32 standard-normal noise.

    Returns (real_action, real_log_prob), each (B, ACTION_DIM) f32.
    """
    B = x.shape[0]
    b128 = _round_up(B, 128)                   # batch is on the lane axis -> multiple of 128
    TB = max(128, min(tb, b128))
    # Keep >= 2 grid steps when the batch is big enough (v7x megacore has 2 TensorCores).
    if TB == b128 and b128 >= 256:
        TB = _round_up(b128 // 2, 128)
    padded_B = _round_up(B, TB)

    # Fused, feature-major streamed input: rows 0..2 = x^T, row 3 = eps^T, rows 4..7 = 0.
    # (Single XLA pass over a tiny (B,4) array; the transpose is needed for the lane-dense
    # kernel layout anyway, so the pad rides along for free.)
    fused = jnp.concatenate([x, eps], axis=1)                                   # (B, 4)
    fused = jnp.pad(fused, ((0, padded_B - B), (0, KPAD - (STATE_DIM + ACTION_DIM))))
    xin = fused.T                                                               # (KPAD, padded_B)

    grid = (padded_B // TB,)
    out = pl.pallas_call(
        actor_kernel,
        out_shape=jax.ShapeDtypeStruct((2, padded_B), jnp.float32),
        grid=grid,
        in_specs=[
            pl.BlockSpec((KPAD, TB), lambda i: (0, i)),        # fused x/eps (streamed)
            pl.BlockSpec((HIDDEN, KPAD), lambda i: (0, 0)),    # w1 padded (resident)
            pl.BlockSpec((HIDDEN, 1), lambda i: (0, 0)),       # b1 column (resident)
            pl.BlockSpec((2, HIDDEN), lambda i: (0, 0)),       # fused head W^T (resident)
            pl.BlockSpec((2, 1), lambda i: (0, 0)),            # fused head b column (resident)
        ],
        out_specs=pl.BlockSpec((2, TB), lambda i: (0, i)),
        compiler_params=pltpu.CompilerParams(
            dimension_semantics=("parallel",)),   # both TCs on v7x; no-op on v5e/v6e
    )(xin, params["w1_pad"], params["b1"], params["wh_T"], params["bh"])

    real_action = out[0:1, :B].T          # (B, 1)
    real_log_prob = out[1:2, :B].T        # (B, 1)
    return real_action, real_log_prob


def init_params(key):
    """Deterministic init mimicking PyTorch Linear's U(-1/sqrt(fan_in), 1/sqrt(fan_in)),
    stored directly in the kernel (feature-major, fused-head) layout."""
    ks = jax.random.split(key, 6)

    def uinit(k, shape, fan_in):
        bound = 1.0 / math.sqrt(fan_in)
        return jax.random.uniform(k, shape, jnp.float32, -bound, bound)

    w1 = uinit(ks[0], (STATE_DIM, HIDDEN), STATE_DIM)          # (3, 128)
    b1 = uinit(ks[1], (HIDDEN,), STATE_DIM)
    wmu = uinit(ks[2], (HIDDEN, ACTION_DIM), HIDDEN)
    bmu = uinit(ks[3], (ACTION_DIM,), HIDDEN)
    wstd = uinit(ks[4], (HIDDEN, ACTION_DIM), HIDDEN)
    bstd = uinit(ks[5], (ACTION_DIM,), HIDDEN)

    w1_pad = jnp.zeros((HIDDEN, KPAD), jnp.float32).at[:, :STATE_DIM].set(w1.T)   # (128, 8)
    wh_T = jnp.concatenate([wmu, wstd], axis=1).T                                  # (2, 128)
    bh = jnp.concatenate([bmu, bstd]).reshape(2, 1)                                # (2, 1)
    return {
        "w1_pad": w1_pad,
        "b1": b1.reshape(HIDDEN, 1),
        "wh_T": wh_T,
        "bh": bh,
    }


def _reference(x, params, eps):
    """Pure-JAX mirror of the PyTorch forward (for correctness check)."""
    w1 = params["w1_pad"][:, :STATE_DIM].T           # (3, 128)
    b1 = params["b1"].reshape(1, HIDDEN)
    wh = params["wh_T"].T                            # (128, 2)
    bh = params["bh"].reshape(1, 2)
    h = jnp.maximum(x @ w1 + b1, 0.0)
    y = h @ wh + bh
    mu = y[:, 0:1]
    std = jax.nn.softplus(y[:, 1:2])
    action = mu + std * eps
    log_prob = -((action - mu) ** 2) / (2.0 * std * std) - jnp.log(std) - LOG_SQRT_2PI
    t = jnp.tanh(action)
    return t * 2.0, log_prob - jnp.log(1.0 - t * t + 1e-7)


if __name__ == "__main__":
    key = jax.random.PRNGKey(0)
    kp, kx, keps = jax.random.split(key, 3)

    B = 8  # small batch of Pendulum states
    params = init_params(kp)
    x = jax.random.normal(kx, (B, STATE_DIM), jnp.float32)
    eps = jax.random.normal(keps, (B, ACTION_DIM), jnp.float32)  # rsample noise

    real_action, real_log_prob = actor_forward(x, params, eps)
    jax.block_until_ready((real_action, real_log_prob))

    assert real_action.shape == (B, ACTION_DIM)
    assert real_log_prob.shape == (B, ACTION_DIM)

    ref_a, ref_lp = _reference(x, params, eps)
    assert jnp.allclose(real_action, ref_a, rtol=1e-3, atol=1e-3)
    assert jnp.allclose(real_log_prob, ref_lp, rtol=1e-3, atol=1e-3)

    print("KERNEL_OK")
</pallas_src>

<mosaic_0001>
module attributes {stable_mosaic.version = 11 : i64} {
  func.func @actor_kernel(%arg0: i32, %arg1: memref<8x128xf32, #tpu.memory_space<vmem>>, %arg2: memref<128x8xf32, #tpu.memory_space<vmem>>, %arg3: memref<128x1xf32, #tpu.memory_space<vmem>>, %arg4: memref<2x128xf32, #tpu.memory_space<vmem>>, %arg5: memref<2x1xf32, #tpu.memory_space<vmem>>, %arg6: memref<2x128xf32, #tpu.memory_space<vmem>>) attributes {dimension_semantics = [#tpu.dimension_semantics<parallel>], iteration_bounds = array<i64: 1>, scalar_prefetch = 0 : i64, scratch_operands = 0 : i64, tpu.core_type = #tpu.core_type<tc>, window_params = [{transform_indices = @transform_0, window_bounds = array<i64: 8, 128>}, {pipeline_mode = #tpu.pipeline_mode<synchronous>, transform_indices = @transform_1, window_bounds = array<i64: 128, 8>}, {pipeline_mode = #tpu.pipeline_mode<synchronous>, transform_indices = @transform_2, window_bounds = array<i64: 128, 1>}, {pipeline_mode = #tpu.pipeline_mode<synchronous>, transform_indices = @transform_3, window_bounds = array<i64: 2, 128>}, {pipeline_mode = #tpu.pipeline_mode<synchronous>, transform_indices = @transform_4, window_bounds = array<i64: 2, 1>}, {transform_indices = @transform_5, window_bounds = array<i64: 2, 128>}]} {
    %c0 = arith.constant 0 : index
    %c0_0 = arith.constant 0 : index
    %0 = vector.load %arg1[%c0, %c0_0] : memref<8x128xf32, #tpu.memory_space<vmem>>, vector<8x128xf32>
    %c0_1 = arith.constant 0 : index
    %c0_2 = arith.constant 0 : index
    %1 = vector.load %arg2[%c0_1, %c0_2] : memref<128x8xf32, #tpu.memory_space<vmem>>, vector<128x8xf32>
    %cst = arith.constant dense<0.000000e+00> : vector<128x128xf32>
    %2 = tpu.matmul %1, %0, %cst {dimension_numbers = #tpu.dot_dimension_numbers<[1], [0], [0], [1], [0, 0, 1, 1], [], []>} : vector<128x8xf32>, vector<8x128xf32>, vector<128x128xf32> -> vector<128x128xf32>
    %c0_3 = arith.constant 0 : index
    %c0_4 = arith.constant 0 : index
    %3 = vector.load %arg3[%c0_3, %c0_4] : memref<128x1xf32, #tpu.memory_space<vmem>>, vector<128x1xf32>
    %4 = vector.broadcast %3 : vector<128x1xf32> to vector<128x128xf32>
    %5 = arith.addf %2, %4 : vector<128x128xf32>
    %cst_5 = arith.constant 0.000000e+00 : f32
    %6 = vector.broadcast %cst_5 : f32 to vector<128x128xf32>
    %7 = arith.maximumf %5, %6 : vector<128x128xf32>
    %c0_6 = arith.constant 0 : index
    %c0_7 = arith.constant 0 : index
    %8 = vector.load %arg4[%c0_6, %c0_7] : memref<2x128xf32, #tpu.memory_space<vmem>>, vector<2x128xf32>
    %cst_8 = arith.constant dense<0.000000e+00> : vector<2x128xf32>
    %9 = tpu.matmul %8, %7, %cst_8 {dimension_numbers = #tpu.dot_dimension_numbers<[1], [0], [0], [1], [0, 0, 1, 1], [], []>} : vector<2x128xf32>, vector<128x128xf32>, vector<2x128xf32> -> vector<2x128xf32>
    %c0_9 = arith.constant 0 : index
    %c0_10 = arith.constant 0 : index
    %10 = vector.load %arg5[%c0_9, %c0_10] : memref<2x1xf32, #tpu.memory_space<vmem>>, vector<2x1xf32>
    %11 = vector.broadcast %10 : vector<2x1xf32> to vector<2x128xf32>
    %12 = arith.addf %9, %11 : vector<2x128xf32>
    %13 = vector.extract_strided_slice %12 {offsets = [0, 0], sizes = [1, 128], strides = [1, 1]} : vector<2x128xf32> to vector<1x128xf32>
    %14 = vector.extract_strided_slice %12 {offsets = [1, 0], sizes = [1, 128], strides = [1, 1]} : vector<2x128xf32> to vector<1x128xf32>
    %cst_11 = arith.constant 0.000000e+00 : f32
    %15 = vector.broadcast %cst_11 : f32 to vector<1x128xf32>
    %16 = arith.maximumf %14, %15 : vector<1x128xf32>
    %17 = vector.broadcast %cst_11 : f32 to vector<1x128xf32>
    %18 = arith.subf %14, %17 : vector<1x128xf32>
    %19 = arith.cmpf one, %18, %18 : vector<1x128xf32>
    %20 = vector.broadcast %cst_11 : f32 to vector<1x128xf32>
    %21 = arith.addf %14, %20 : vector<1x128xf32>
    %22 = math.absf %18 : vector<1x128xf32>
    %cst_12 = arith.constant 0.000000e+00 : f32
    %23 = vector.broadcast %cst_12 : f32 to vector<1x128xf32>
    %24 = arith.subf %23, %22 : vector<1x128xf32>
    %25 = math.exp %24 : vector<1x128xf32>
    %26 = math.log1p %25 : vector<1x128xf32>
    %27 = arith.addf %16, %26 : vector<1x128xf32>
    %28 = arith.select %19, %21, %27 : vector<1x128xi1>, vector<1x128xf32>
    %29 = vector.extract_strided_slice %0 {offsets = [3, 0], sizes = [1, 128], strides = [1, 1]} : vector<8x128xf32> to vector<1x128xf32>
    %30 = arith.mulf %28, %29 : vector<1x128xf32>
    %31 = arith.addf %13, %30 : vector<1x128xf32>
    %cst_13 = arith.constant -5.000000e-01 : f32
    %32 = vector.broadcast %cst_13 : f32 to vector<1x128xf32>
    %33 = arith.mulf %32, %29 : vector<1x128xf32>
    %34 = arith.mulf %33, %29 : vector<1x128xf32>
    %35 = math.log %28 : vector<1x128xf32>
    %36 = arith.subf %34, %35 : vector<1x128xf32>
    %cst_14 = arith.constant 0.918938517 : f32
    %37 = vector.broadcast %cst_14 : f32 to vector<1x128xf32>
    %38 = arith.subf %36, %37 : vector<1x128xf32>
    %39 = math.tanh %31 : vector<1x128xf32>
    %cst_15 = arith.constant 2.000000e+00 : f32
    %40 = vector.broadcast %cst_15 : f32 to vector<1x128xf32>
    %41 = arith.mulf %39, %40 : vector<1x128xf32>
    %c0_16 = arith.constant 0 : index
    %c0_17 = arith.constant 0 : index
    %42 = vector.load %arg6[%c0_16, %c0_17] : memref<2x128xf32, #tpu.memory_space<vmem>>, vector<1x128xf32>
    tpu.vector_store %arg6[%c0_16, %c0_17], %41 {strides = array<i32>} : memref<2x128xf32, #tpu.memory_space<vmem>>, vector<1x128xf32>,
    %43 = arith.mulf %39, %39 : vector<1x128xf32>
    %cst_18 = arith.constant 1.000000e+00 : f32
    %44 = vector.broadcast %cst_18 : f32 to vector<1x128xf32>
    %45 = arith.subf %44, %43 : vector<1x128xf32>
    %cst_19 = arith.constant 1.000000e-07 : f32
    %46 = vector.broadcast %cst_19 : f32 to vector<1x128xf32>
    %47 = arith.addf %45, %46 : vector<1x128xf32>
    %48 = math.log %47 : vector<1x128xf32>
    %49 = arith.subf %38, %48 : vector<1x128xf32>
    %c1 = arith.constant 1 : index
    %c0_20 = arith.constant 0 : index
    %50 = vector.load %arg6[%c1, %c0_20] : memref<2x128xf32, #tpu.memory_space<vmem>>, vector<1x128xf32>
    tpu.vector_store %arg6[%c1, %c0_20], %49 {strides = array<i32>} : memref<2x128xf32, #tpu.memory_space<vmem>>, vector<1x128xf32>,
    return
  }
  func.func @transform_0(%arg0: i32) -> (i32, i32) {
    %c0_i32 = arith.constant 0 : i32
    %c0_i32_0 = arith.constant 0 : i32
    return %c0_i32, %arg0 : i32, i32
  }
  func.func @transform_1(%arg0: i32) -> (i32, i32) {
    %c0_i32 = arith.constant 0 : i32
    %c0_i32_0 = arith.constant 0 : i32
    %c0_i32_1 = arith.constant 0 : i32
    return %c0_i32, %c0_i32_0 : i32, i32
  }
  func.func @transform_2(%arg0: i32) -> (i32, i32) {
    %c0_i32 = arith.constant 0 : i32
    %c0_i32_0 = arith.constant 0 : i32
    %c0_i32_1 = arith.constant 0 : i32
    return %c0_i32, %c0_i32_0 : i32, i32
  }
  func.func @transform_3(%arg0: i32) -> (i32, i32) {
    %c0_i32 = arith.constant 0 : i32
    %c0_i32_0 = arith.constant 0 : i32
    %c0_i32_1 = arith.constant 0 : i32
    return %c0_i32, %c0_i32_0 : i32, i32
  }
  func.func @transform_4(%arg0: i32) -> (i32, i32) {
    %c0_i32 = arith.constant 0 : i32
    %c0_i32_0 = arith.constant 0 : i32
    %c0_i32_1 = arith.constant 0 : i32
    return %c0_i32, %c0_i32_0 : i32, i32
  }
  func.func @transform_5(%arg0: i32) -> (i32, i32) {
    %c0_i32 = arith.constant 0 : i32
    %c0_i32_0 = arith.constant 0 : i32
    return %c0_i32, %arg0 : i32, i32
  }
}

</mosaic_0001>

<llo_original>
// kernel: tpu_custom_call.1
$region0: #{tpu_custom_call.1}
  #allocation0 [shape = 'u32[]', space=smem, size = 0x4, offset = 0x4, fixed_abs, tag = 'smem constant byte address 0x4 - core index']
  #allocation1 [shape = 'u32[144,128]{1,0:T(1,128)}', space=vmem, size = 0x12000, scoped, tag = 'internal scratch']
  %s0 = inlined_call_operand.vmem [shape: f32[8,128], index: 0, kind: input, shape index: {}]
  %s1 = inlined_call_operand.vmem [shape: f32[128,8], index: 1, kind: input, shape index: {}]
  %s2 = inlined_call_operand.vmem [shape: f32[128,1], index: 2, kind: input, shape index: {}]
  %s3 = inlined_call_operand.vmem [shape: f32[2,128], index: 3, kind: input, shape index: {}]
  %s4 = inlined_call_operand.vmem [shape: f32[2,1], index: 4, kind: input, shape index: {}]
  %s5 = inlined_call_operand.hbm [shape: f32[2,128], index: 5, kind: output, shape index: {}]
  %s6 = sld [smem:[#allocation0]]
  $region30: #{tpu_custom_call.1} parent=0
    _
  %s8 = ssub.s32 1, %s6
  %s9 = scalar_select 0, %s8, %s6
  $region1: #{tpu_custom_call.1} parent=0
    #allocation2 [shape = 'u8[1024]{0}', space=vmem, size = 0x400, scoped, tag = 'output window, operand 0, single buffered']
    #allocation3 [shape = 's32[1]{0}', space=sflag, size = 0x4, scoped, tag = 'scoped memory for tpu_custom_call.1']
    %10 = vsyncpa [#allocation3], 0
    // Predicated region
    $region2: #{tpu_custom_call.1} parent=1 // pred_check
      _
    $region3: #{tpu_custom_call.1} parent=1 // pred_check_branch
      %12 = sbr.rel (0) target = $region5
    $region4: #{tpu_custom_call.1} parent=1 // pred_region
      _
    $region5: #{tpu_custom_call.1} parent=1 // pred_fallthru
      _
    // Predicated region
    $region6: #{tpu_custom_call.1} parent=1 // pred_check
      _
    $region7: #{tpu_custom_call.1} parent=1 // pred_check_branch
      %14 = sbr.rel (0) target = $region9
    $region8: #{tpu_custom_call.1} parent=1 // pred_region
      _
    $region9: #{tpu_custom_call.1} parent=1 // pred_fallthru
      _
    // Predicated region
    $region10: #{tpu_custom_call.1} parent=1 // pred_check
      _
    $region11: #{tpu_custom_call.1} parent=1 // pred_check_branch
      %16 = sbr.rel (0) target = $region13
    $region12: #{tpu_custom_call.1} parent=1 // pred_region
      _
    $region13: #{tpu_custom_call.1} parent=1 // pred_fallthru
      _
    // Predicated region
    $region14: #{tpu_custom_call.1} parent=1 // pred_check
      _
    $region15: #{tpu_custom_call.1} parent=1 // pred_check_branch
      %18 = sbr.rel (0) target = $region17
    $region16: #{tpu_custom_call.1} parent=1 // pred_region
      _
    $region17: #{tpu_custom_call.1} parent=1 // pred_fallthru
      _
    // Predicated region
    $region18: #{tpu_custom_call.1} parent=1 // pred_check
      _
    $region19: #{tpu_custom_call.1} parent=1 // pred_check_branch
      %20 = sbr.rel (0) target = $region21
    $region20: #{tpu_custom_call.1} parent=1 // pred_region
      _
    $region21: #{tpu_custom_call.1} parent=1 // pred_fallthru
      _
    %v21 = vld [vmem:[%s0] sm:$0xff]
    %v22 = vld [vmem:[%s1] sm:$0xff]
    %v23 = vld [vmem:[%s1 + $0x8] sm:$0xff]
    %v24 = vld [vmem:[%s1 + $0x10] sm:$0xff]
    %v25 = vld [vmem:[%s1 + $0x18] sm:$0xff]
    %v26 = vld [vmem:[%s1 + $0x20] sm:$0xff]
    %v27 = vld [vmem:[%s1 + $0x28] sm:$0xff]
    %v28 = vld [vmem:[%s1 + $0x30] sm:$0xff]
    %v29 = vld [vmem:[%s1 + $0x38] sm:$0xff]
    %v30 = vld [vmem:[%s1 + $0x40] sm:$0xff]
    %v31 = vld [vmem:[%s1 + $0x48] sm:$0xff]
    %v32 = vld [vmem:[%s1 + $0x50] sm:$0xff]
    %v33 = vld [vmem:[%s1 + $0x58] sm:$0xff]
    %v34 = vld [vmem:[%s1 + $0x60] sm:$0xff]
    %v35 = vld [vmem:[%s1 + $0x68] sm:$0xff]
    %v36 = vld [vmem:[%s1 + $0x70] sm:$0xff]
    %v37 = vld [vmem:[%s1 + $0x78] sm:$0xff]
    %v38 = vld [vmem:[%s2] sm:$0xff]
    %v39 = vld [vmem:[%s2 + $0x8] sm:$0xff]
    %v40 = vld [vmem:[%s2 + $0x10] sm:$0xff]
    %v41 = vld [vmem:[%s2 + $0x18] sm:$0xff]
    %v42 = vld [vmem:[%s2 + $0x20] sm:$0xff]
    %v43 = vld [vmem:[%s2 + $0x28] sm:$0xff]
    %v44 = vld [vmem:[%s2 + $0x30] sm:$0xff]
    %v45 = vld [vmem:[%s2 + $0x38] sm:$0xff]
    %v46 = vld [vmem:[%s2 + $0x40] sm:$0xff]
    %v47 = vld [vmem:[%s2 + $0x48] sm:$0xff]
    %v48 = vld [vmem:[%s2 + $0x50] sm:$0xff]
    %v49 = vld [vmem:[%s2 + $0x58] sm:$0xff]
    %v50 = vld [vmem:[%s2 + $0x60] sm:$0xff]
    %v51 = vld [vmem:[%s2 + $0x68] sm:$0xff]
    %v52 = vld [vmem:[%s2 + $0x70] sm:$0xff]
    %v53 = vld [vmem:[%s2 + $0x78] sm:$0xff]
    %55 = vset.pattern.permute.xlu0 0
    %56 = vperm.xlu0 %55, %v38
    %v57 = vpop.permute.xlu0 %56
    %60 = vset.pattern.permute.xlu0 0
    %61 = vperm.xlu0 %60, %v39
    %v62 = vpop.permute.xlu0 %61
    %65 = vset.pattern.permute.xlu0 0
    %66 = vperm.xlu0 %65, %v40
    %v67 = vpop.permute.xlu0 %66
    %70 = vset.pattern.permute.xlu0 0
    %71 = vperm.xlu0 %70, %v41
    %v72 = vpop.permute.xlu0 %71
    %75 = vset.pattern.permute.xlu0 0
    %76 = vperm.xlu0 %75, %v42
    %v77 = vpop.permute.xlu0 %76
    %80 = vset.pattern.permute.xlu0 0
    %81 = vperm.xlu0 %80, %v43
    %v82 = vpop.permute.xlu0 %81
    %85 = vset.pattern.permute.xlu0 0
    %86 = vperm.xlu0 %85, %v44
    %v87 = vpop.permute.xlu0 %86
    %90 = vset.pattern.permute.xlu0 0
    %91 = vperm.xlu0 %90, %v45
    %v92 = vpop.permute.xlu0 %91
    %95 = vset.pattern.permute.xlu0 0
    %96 = vperm.xlu0 %95, %v46
    %v97 = vpop.permute.xlu0 %96
    %100 = vset.pattern.permute.xlu0 0
    %101 = vperm.xlu0 %100, %v47
    %v102 = vpop.permute.xlu0 %101
    %105 = vset.pattern.permute.xlu0 0
    %106 = vperm.xlu0 %105, %v48
    %v107 = vpop.permute.xlu0 %106
    %110 = vset.pattern.permute.xlu0 0
    %111 = vperm.xlu0 %110, %v49
    %v112 = vpop.permute.xlu0 %111
    %115 = vset.pattern.permute.xlu0 0
    %116 = vperm.xlu0 %115, %v50
    %v117 = vpop.permute.xlu0 %116
    %120 = vset.pattern.permute.xlu0 0
    %121 = vperm.xlu0 %120, %v51
    %v122 = vpop.permute.xlu0 %121
    %125 = vset.pattern.permute.xlu0 0
    %126 = vperm.xlu0 %125, %v52
    %v127 = vpop.permute.xlu0 %126
    %130 = vset.pattern.permute.xlu0 0
    %131 = vperm.xlu0 %130, %v53
    %v132 = vpop.permute.xlu0 %131
    %vm134 = vcmask 64512
    %v136 = vsel %vm134, %v22, 0
    %v139 = vsel %vm134, %v23, 0
    %v142 = vsel %vm134, %v24, 0
    %v145 = vsel %vm134, %v25, 0
    %v148 = vsel %vm134, %v26, 0
    %v151 = vsel %vm134, %v27, 0
    %v154 = vsel %vm134, %v28, 0
    %v157 = vsel %vm134, %v29, 0
    %v160 = vsel %vm134, %v30, 0
    %v163 = vsel %vm134, %v31, 0
    %v166 = vsel %vm134, %v32, 0
    %v169 = vsel %vm134, %v33, 0
    %v172 = vsel %vm134, %v34, 0
    %v175 = vsel %vm134, %v35, 0
    %v178 = vsel %vm134, %v36, 0
    %v181 = vsel %vm134, %v37, 0
    %183 = vmatprep.subr.mxu0 0.0
    %184 = vmatpush1.msra.mxu0 0.0
    %185 = vmatprep.subr.mxu0 0.0
    %186 = vmatpush1.msra.mxu0 0.0
    %187 = vmatprep.subr.mxu0 0.0
    %188 = vmatpush1.msra.mxu0 0.0
    %189 = vmatprep.subr.mxu0 0.0
    %190 = vmatpush1.msra.mxu0 0.0
    %191 = vmatprep.subr.mxu0 0.0
    %192 = vmatpush1.msra.mxu0 0.0
    %193 = vmatprep.subr.mxu0 0.0
    %194 = vmatpush1.msra.mxu0 0.0
    %195 = vmatprep.subr.mxu0 0.0
    %196 = vmatpush1.msra.mxu0 0.0
    %197 = vmatprep.subr.mxu0 0.0
    %198 = vmatpush1.msra.mxu0 0.0
    %199 = vmatprep.subr.mxu0 0.0
    %200 = vmatpush1.msra.mxu0 0.0
    %201 = vmatprep.subr.mxu0 0.0
    %202 = vmatpush1.msra.mxu0 0.0
    %203 = vmatprep.subr.mxu0 0.0
    %204 = vmatpush1.msra.mxu0 0.0
    %205 = vmatprep.subr.mxu0 0.0
    %206 = vmatpush1.msra.mxu0 0.0
    %207 = vmatprep.subr.mxu0 0.0
    %208 = vmatpush1.msra.mxu0 0.0
    %209 = vmatprep.subr.mxu0 0.0
    %210 = vmatpush1.msra.mxu0 0.0
    %211 = vmatprep.subr.mxu0 0.0
    %212 = vmatpush1.msra.mxu0 0.0
    %213 = vmatprep.subr.mxu0 0.0
    %214 = vmatpush1.msra.mxu0 %v21
    %215 = vmatprep.subr.mxu0 0.0
    %216 = vmatpush2.msra.mxu0 0.0
    %217 = vmatprep.subr.mxu0 0.0
    %218 = vmatpush2.msra.mxu0 0.0
    %219 = vmatprep.subr.mxu0 0.0
    %220 = vmatpush2.msra.mxu0 0.0
    %221 = vmatprep.subr.mxu0 0.0
    %222 = vmatpush2.msra.mxu0 0.0
    %223 = vmatprep.subr.mxu0 0.0
    %224 = vmatpush2.msra.mxu0 0.0
    %225 = vmatprep.subr.mxu0 0.0
    %226 = vmatpush2.msra.mxu0 0.0
    %227 = vmatprep.subr.mxu0 0.0
    %228 = vmatpush2.msra.mxu0 0.0
    %229 = vmatprep.subr.mxu0 0.0
    %230 = vmatpush2.msra.mxu0 0.0
    %231 = vmatprep.subr.mxu0 0.0
    %232 = vmatpush2.msra.mxu0 0.0
    %233 = vmatprep.subr.mxu0 0.0
    %234 = vmatpush2.msra.mxu0 0.0
    %235 = vmatprep.subr.mxu0 0.0
    %236 = vmatpush2.msra.mxu0 0.0
    %237 = vmatprep.subr.mxu0 0.0
    %238 = vmatpush2.msra.mxu0 0.0
    %239 = vmatprep.subr.mxu0 0.0
    %240 = vmatpush2.msra.mxu0 0.0
    %241 = vmatprep.subr.mxu0 0.0
    %242 = vmatpush2.msra.mxu0 0.0
    %243 = vmatprep.subr.mxu0 0.0
    %244 = vmatpush2.msra.mxu0 0.0
    %245 = vmatprep.subr.mxu0 0.0
    %246 = vmatpush2.msra.mxu0 0.0
    %247 = vmatprep.mubr.f32.mxu0 0.0
    %248 = vmatmul.mubr.f32.gmra.mxu0 %v136
    %v249 = vpop.f32.mrf.mxu0
    %v250 = vadd.f32 %v57, %v249
    %v251 = vpop.f32.mrf.mxu0
    %252 = vmatprep.mubr.f32.mxu0 0.0
    %253 = vmatmul.mubr.f32.gmra.mxu0 %v139
    %v254 = vpop.f32.mrf.mxu0
    %v255 = vadd.f32 %v62, %v254
    %v256 = vpop.f32.mrf.mxu0
    %257 = vmatprep.mubr.f32.mxu0 0.0
    %258 = vmatmul.mubr.f32.gmra.mxu0 %v142
    %v259 = vpop.f32.mrf.mxu0
    %v260 = vadd.f32 %v67, %v259
    %v261 = vpop.f32.mrf.mxu0
    %262 = vmatprep.mubr.f32.mxu0 0.0
    %263 = vmatmul.mubr.f32.gmra.mxu0 %v145
    %v264 = vpop.f32.mrf.mxu0
    %v265 = vadd.f32 %v72, %v264
    %v266 = vpop.f32.mrf.mxu0
    %267 = vmatprep.mubr.f32.mxu0 0.0
    %268 = vmatmul.mubr.f32.gmra.mxu0 %v148
    %v269 = vpop.f32.mrf.mxu0
    %v270 = vadd.f32 %v77, %v269
    %v271 = vpop.f32.mrf.mxu0
    %272 = vmatprep.mubr.f32.mxu0 0.0
    %273 = vmatmul.mubr.f32.gmra.mxu0 %v151
    %v274 = vpop.f32.mrf.mxu0
    %v275 = vadd.f32 %v82, %v274
    %v276 = vpop.f32.mrf.mxu0
    %277 = vmatprep.mubr.f32.mxu0 0.0
    %278 = vmatmul.mubr.f32.gmra.mxu0 %v154
    %v279 = vpop.f32.mrf.mxu0
    %v280 = vadd.f32 %v87, %v279
    %v281 = vpop.f32.mrf.mxu0
    %282 = vmatprep.mubr.f32.mxu0 0.0
    %283 = vmatmul.mubr.f32.gmra.mxu0 %v157
    %v284 = vpop.f32.mrf.mxu0
    %v285 = vadd.f32 %v92, %v284
    %v286 = vpop.f32.mrf.mxu0
    %287 = vmatprep.mubr.f32.mxu0 0.0
    %288 = vmatmul.mubr.f32.gmra.mxu0 %v160
    %v289 = vpop.f32.mrf.mxu0
    %v290 = vadd.f32 %v97, %v289
    %v291 = vpop.f32.mrf.mxu0
    %292 = vmatprep.mubr.f32.mxu0 0.0
    %293 = vmatmul.mubr.f32.gmra.mxu0 %v163
    %v294 = vpop.f32.mrf.mxu0
    %v295 = vadd.f32 %v102, %v294
    %v296 = vpop.f32.mrf.mxu0
    %297 = vmatprep.mubr.f32.mxu0 0.0
    %298 = vmatmul.mubr.f32.gmra.mxu0 %v166
    %v299 = vpop.f32.mrf.mxu0
    %v300 = vadd.f32 %v107, %v299
    %v301 = vpop.f32.mrf.mxu0
    %302 = vmatprep.mubr.f32.mxu0 0.0
    %303 = vmatmul.mubr.f32.gmra.mxu0 %v169
    %v304 = vpop.f32.mrf.mxu0
    %v305 = vadd.f32 %v112, %v304
    %v306 = vpop.f32.mrf.mxu0
    %307 = vmatprep.mubr.f32.mxu0 0.0
    %308 = vmatmul.mubr.f32.gmra.mxu0 %v172
    %v309 = vpop.f32.mrf.mxu0
    %v310 = vadd.f32 %v117, %v309
    %v311 = vpop.f32.mrf.mxu0
    %312 = vmatprep.mubr.f32.mxu0 0.0
    %313 = vmatmul.mubr.f32.gmra.mxu0 %v175
    %v314 = vpop.f32.mrf.mxu0
    %v315 = vadd.f32 %v122, %v314
    %v316 = vpop.f32.mrf.mxu0
    %317 = vmatprep.mubr.f32.mxu0 0.0
    %318 = vmatmul.mubr.f32.gmra.mxu0 %v178
    %v319 = vpop.f32.mrf.mxu0
    %v320 = vadd.f32 %v127, %v319
    %v321 = vpop.f32.mrf.mxu0
    %322 = vmatprep.mubr.f32.mxu0 0.0
    %323 = vmatmul.mubr.f32.gmra.mxu0 %v181
    %v324 = vpop.f32.mrf.mxu0
    %v325 = vadd.f32 %v132, %v324
    %v326 = vpop.f32.mrf.mxu0
    %327 = vdwg.mxu0
    %v328 = vmax.f32 %v250, 0.0
    %v329 = vmax.f32 %v255, 0.0
    %v330 = vmax.f32 %v260, 0.0
    %v331 = vmax.f32 %v265, 0.0
    %v332 = vmax.f32 %v270, 0.0
    %v333 = vmax.f32 %v275, 0.0
    %v334 = vmax.f32 %v280, 0.0
    %v335 = vmax.f32 %v285, 0.0
    %v336 = vmax.f32 %v290, 0.0
    %v337 = vmax.f32 %v295, 0.0
    %v338 = vmax.f32 %v300, 0.0
    %v339 = vmax.f32 %v305, 0.0
    %v340 = vmax.f32 %v310, 0.0
    %v341 = vmax.f32 %v315, 0.0
    %v342 = vmax.f32 %v320, 0.0
    %v343 = vmax.f32 %v325, 0.0
    %v344 = vld [vmem:[%s3] sm:$0x3]
    %v345 = vld [vmem:[%s4] sm:$0x3]
    %347 = vset.pattern.permute.xlu0 0
    %348 = vperm.xlu0 %347, %v345
    %v349 = vpop.permute.xlu0 %348
    %351 = vmatprep.subr.mxu0 0.0
    %352 = vmatpush1.msra.mxu0 %v343
    %353 = vmatprep.subr.mxu0 0.0
    %354 = vmatpush1.msra.mxu0 %v342
    %355 = vmatprep.subr.mxu0 0.0
    %356 = vmatpush1.msra.mxu0 %v341
    %357 = vmatprep.subr.mxu0 0.0
    %358 = vmatpush1.msra.mxu0 %v340
    %359 = vmatprep.subr.mxu0 0.0
    %360 = vmatpush1.msra.mxu0 %v339
    %361 = vmatprep.subr.mxu0 0.0
    %362 = vmatpush1.msra.mxu0 %v338
    %363 = vmatprep.subr.mxu0 0.0
    %364 = vmatpush1.msra.mxu0 %v337
    %365 = vmatprep.subr.mxu0 0.0
    %366 = vmatpush1.msra.mxu0 %v336
    %367 = vmatprep.subr.mxu0 0.0
    %368 = vmatpush1.msra.mxu0 %v335
    %369 = vmatprep.subr.mxu0 0.0
    %370 = vmatpush1.msra.mxu0 %v334
    %371 = vmatprep.subr.mxu0 0.0
    %372 = vmatpush1.msra.mxu0 %v333
    %373 = vmatprep.subr.mxu0 0.0
    %374 = vmatpush1.msra.mxu0 %v332
    %375 = vmatprep.subr.mxu0 0.0
    %376 = vmatpush1.msra.mxu0 %v331
    %377 = vmatprep.subr.mxu0 0.0
    %378 = vmatpush1.msra.mxu0 %v330
    %379 = vmatprep.subr.mxu0 0.0
    %380 = vmatpush1.msra.mxu0 %v329
    %381 = vmatprep.subr.mxu0 0.0
    %382 = vmatpush1.msra.mxu0 %v328
    %383 = vmatprep.subr.mxu0 0.0
    %384 = vmatpush2.msra.mxu0 0.0
    %385 = vmatprep.subr.mxu0 0.0
    %386 = vmatpush2.msra.mxu0 0.0
    %387 = vmatprep.subr.mxu0 0.0
    %388 = vmatpush2.msra.mxu0 0.0
    %389 = vmatprep.subr.mxu0 0.0
    %390 = vmatpush2.msra.mxu0 0.0
    %391 = vmatprep.subr.mxu0 0.0
    %392 = vmatpush2.msra.mxu0 0.0
    %393 = vmatprep.subr.mxu0 0.0
    %394 = vmatpush2.msra.mxu0 0.0
    %395 = vmatprep.subr.mxu0 0.0
    %396 = vmatpush2.msra.mxu0 0.0
    %397 = vmatprep.subr.mxu0 0.0
    %398 = vmatpush2.msra.mxu0 0.0
    %399 = vmatprep.subr.mxu0 0.0
    %400 = vmatpush2.msra.mxu0 0.0
    %401 = vmatprep.subr.mxu0 0.0
    %402 = vmatpush2.msra.mxu0 0.0
    %403 = vmatprep.subr.mxu0 0.0
    %404 = vmatpush2.msra.mxu0 0.0
    %405 = vmatprep.subr.mxu0 0.0
    %406 = vmatpush2.msra.mxu0 0.0
    %407 = vmatprep.subr.mxu0 0.0
    %408 = vmatpush2.msra.mxu0 0.0
    %409 = vmatprep.subr.mxu0 0.0
    %410 = vmatpush2.msra.mxu0 0.0
    %411 = vmatprep.subr.mxu0 0.0
    %412 = vmatpush2.msra.mxu0 0.0
    %413 = vmatprep.subr.mxu0 0.0
    %414 = vmatpush2.msra.mxu0 0.0
    %415 = vmatprep.mubr.f32.mxu0 0.0
    %416 = vmatmul.mubr.f32.gmra.mxu0 %v344
    %v417 = vpop.f32.mrf.mxu0
    %v418 = vadd.f32 %v349, %v417
    %v419 = vpop.f32.mrf.mxu0
    %420 = vdwg.mxu0
    %v421 = vmax.f32 %v418, 0.0
    %vm422 = vcmp.ne.f32.partialorder %v418, %v418
    %v423 = vadd.f32 %v418, 0.0
    %v424 = vand.u32 2147483647, %v418
    %v425 = vsub.f32 0.0, %v424
    %v426 = vmul.f32 %v425, 1.442695
    %v427 = vpow.pop %v426
    %v428 = vadd.f32 %v427, 1.0
    %v429 = vlog2.pop %v428
    %v430 = vmul.f32 %v429, 0.6931472
    %v431 = vmul.f32 -0.5, %v427
    %v432 = vadd.f32 %v431, 1.0
    %v433 = vmul.f32 %v432, %v427
    %v434 = vand.u32 2147483647, %v427
    %vm435 = vcmp.lt.f32.partialorder %v434, 0.0004427343
    %v436 = vsel %vm435, %v433, %v430
    %v437 = vadd.f32 %v421, %v436
    %v438 = vsel %vm422, %v423, %v437
    %v440 = vrot.slane %v21, 2
    %v442 = vmul.f32 %v438, %v440
    %v444 = vrot.slane %v442, 1
    %v446 = vadd.f32 %v418, %v444
    %v447 = vmul.f32 %v21, -0.5
    %v448 = vmul.f32 %v447, %v21
    %v449 = vlog2.pop %v438
    %v450 = vmul.f32 %v449, 0.6931472
    %v452 = vrot.slane %v450, 6
    %v454 = vsub.f32 %v448, %v452
    %v455 = vsub.f32 %v454, 0.9189385
    %v456 = vtanh.pop %v446
    %v457 = vmul.f32 %v456, 2.0
    %458 = vst [vmem:[#allocation2] sm:$0x1] %v457
    %v459 = vmul.f32 %v456, %v456
    %v460 = vsub.f32 1.0, %v459
    %v461 = vadd.f32 %v460, 1e-07
    %v462 = vlog2.pop %v461
    %v463 = vmul.f32 %v462, 0.6931472
    %v465 = vrot.slane %v463, 5
    %v467 = vsub.f32 %v455, %v465
    %468 = vst [vmem:[#allocation2 - $0x2] sm:$0x8] %v467
    // Predicated region
    $region22: #{tpu_custom_call.1} parent=1 // pred_check
      _
    $region23: #{tpu_custom_call.1} parent=1 // pred_check_branch
      %470 = sbr.rel (0) target = $region25
    $region24: #{tpu_custom_call.1} parent=1 // pred_region
      %s472 = ssub.s32 32, 32
      %473 = vsyncadd [#allocation3], %s472
      %s475 = sshll.u32 [#allocation2], 4
      %s476 = int_to_ptr.vmem [resolvable:$true] %s475
      %478 = dma.vmem_to_hbm [thread:$0]  %s476, 32, %s5, [#allocation3]
    $region25: #{tpu_custom_call.1} parent=1 // pred_fallthru
      _
    // Predicated region
    $region26: #{tpu_custom_call.1} parent=1 // pred_check
      _
    $region27: #{tpu_custom_call.1} parent=1 // pred_check_branch
      %480 = sbr.rel (0) target = $region29
    $region28: #{tpu_custom_call.1} parent=1 // pred_region
      %481 = dma.done [#allocation3], 32
    $region29: #{tpu_custom_call.1} parent=1 // pred_fallthru
      _
    %482 = vsyncpa [#allocation3], 1

</llo_original>
